<compile_context>
chip_gen: v6e
topology: v6e:2x2x1
jax: 0.10.0
libtpu: 0.0.40
codegen_flags: <defaults>
</compile_context>

<pallas_src>
import functools
import inspect

import jax
import jax.numpy as jnp
from jax import lax
from jax.experimental import pallas as pl
from jax.experimental.pallas import tpu as pltpu


def _round_up(a, b):
    return (a + b - 1) // b * b


def _cdiv(a, b):
    return (a + b - 1) // b


def _dist_kernel(nk, xr_ref, xc_ref, sqr_ref, sqc_ref, out_ref, acc_ref):
    """One (tile, tile) block of cdist(x, x), K-tiled over the feature axis.

    xr_ref : (tile, tk)   row panel of x          block (i, k)
    xc_ref : (tile, tk)   column panel of x       block (j, k)
    sqr_ref: (tile, 1)    squared row norms       block (i, 0)
    sqc_ref: (1, tile)    squared col norms       block (0, j)
    out_ref: (tile, tile) distance tile           block (i, j), written on last k
    acc_ref: (tile, tile) f32 gram accumulator    VMEM scratch
    """
    # Hoist every pl.program_id out of the pl.when branches (required for the
    # interpret fallback; free on TPU).
    i = pl.program_id(0)
    j = pl.program_id(1)
    k = pl.program_id(2)
    last_k = k == nk - 1
    on_diag = i == j

    @pl.when(k == 0)
    def _init():
        acc_ref[...] = jnp.zeros_like(acc_ref)

    # Gram tile on the MXU: contract the feature (last) axis of BOTH operands
    # (A @ B^T form -> no XLU transpose of either panel), f32 accumulation.
    acc_ref[...] += lax.dot_general(
        xr_ref[...],
        xc_ref[...],
        dimension_numbers=(((1,), (1,)), ((), ())),
        preferred_element_type=jnp.float32,
    )

    @pl.when(last_k)
    def _epilogue():
        d2 = sqr_ref[...] + sqc_ref[...] - 2.0 * acc_ref[...]
        d2 = jnp.maximum(d2, 0.0)
        out_ref[...] = jnp.sqrt(d2).astype(out_ref.dtype)

    # Exact zeros on the self-distance diagonal; only diagonal blocks pay for
    # the iota / compare / select (inside a diagonal block, global row == col
    # reduces to local r == c, so no program_id is needed in the branch).
    @pl.when(last_k & on_diag)
    def _zero_diag():
        tm, tn = acc_ref.shape
        r = lax.broadcasted_iota(jnp.int32, (tm, tn), 0)
        c = lax.broadcasted_iota(jnp.int32, (tm, tn), 1)
        cur = out_ref[...]
        out_ref[...] = jnp.where(r == c, jnp.zeros_like(cur), cur)


def pairwise_distance_layer(x, *, tile=None, max_tk=512):
    """Pallas equivalent of PairwiseDistanceLayer.forward for x of shape (N, D)."""
    n, d = x.shape

    # Output row/col tile: lane-dense and MXU-width aware (>=256 on v6e/v7x
    # once there is enough work, 512 for large point sets).
    if tile is None:
        if n >= 512:
            tile = 512
        elif n >= 256:
            tile = 256
        else:
            tile = 128

    # Feature (contraction) axis: pad to the 128-lane boundary only, and tile
    # it (third grid axis) so per-step VMEM stays bounded for any D.
    dp = _round_up(d, 128)
    if dp <= max_tk:
        tk = dp
        nk = 1
    else:
        nk = _cdiv(dp, max_tk)
        tk = _round_up(_cdiv(dp, nk), 128)
        dp = tk * nk

    np_ = _round_up(n, tile)  # padded number of points

    # Zero-pad extra rows / feature columns: zero features change no distance,
    # and padded rows/cols never reach the exact (n, n) output (out-of-bounds
    # block writes are masked).
    x_pad = jnp.pad(x, ((0, np_ - n), (0, dp - d)))

    # Squared row norms, computed once (O(N*D) prepass), fed in both layouts so
    # the kernel never transposes.  (Norms in f32 while the gram uses native
    # dtype operands with f32 accumulation; any tiny negative d2 for bf16
    # inputs is clamped.)
    sq = jnp.sum(x_pad.astype(jnp.float32) ** 2, axis=1, keepdims=True)  # (Np, 1)
    sq_col = sq.reshape(1, np_)                                          # (1, Np)

    grid = (np_ // tile, np_ // tile, nk)

    call_kwargs = dict(
        out_shape=jax.ShapeDtypeStruct((n, n), x.dtype),  # exact, no re-slicing
        grid=grid,
        in_specs=[
            pl.BlockSpec((tile, tk), lambda i, j, k: (i, k)),  # row panel of x
            pl.BlockSpec((tile, tk), lambda i, j, k: (j, k)),  # col panel of x
            pl.BlockSpec((tile, 1), lambda i, j, k: (i, 0)),   # ||x_i||^2
            pl.BlockSpec((1, tile), lambda i, j, k: (0, j)),   # ||x_j||^2
        ],
        out_specs=pl.BlockSpec((tile, tile), lambda i, j, k: (i, j)),
        scratch_shapes=[pltpu.VMEM((tile, tile), jnp.float32)],
        compiler_params=pltpu.CompilerParams(
            dimension_semantics=("parallel", "parallel", "arbitrary")),
    )

    # Advisory scheduler hint (lets XLA overlap the pad / norm prepass / concat
    # with the kernel).  Guarded so older Pallas versions still run.
    try:
        has_cost = (hasattr(pl, "CostEstimate")
                    and "cost_estimate" in inspect.signature(pl.pallas_call).parameters)
    except (TypeError, ValueError):
        has_cost = False
    if has_cost:
        itemsize = jnp.dtype(x.dtype).itemsize
        call_kwargs["cost_estimate"] = pl.CostEstimate(
            flops=2 * np_ * np_ * dp + 6 * np_ * np_,
            transcendentals=np_ * np_,
            bytes_accessed=2 * (np_ // tile) * np_ * dp * itemsize + n * n * itemsize,
        )

    dist = pl.pallas_call(functools.partial(_dist_kernel, nk), **call_kwargs)(
        x_pad, x_pad, sq, sq_col)

    # forward(x) = cat((x, cdist(x, x)), dim=1): one concat of already
    # unpadded arrays.
    return jnp.concatenate([x, dist], axis=1)


def _reference(x):
    # Pure-JAX reference (direct-difference formulation, like torch.cdist's
    # small-size path).
    diff = x[:, None, :] - x[None, :, :]
    dist = jnp.sqrt(jnp.sum(diff * diff, axis=-1))
    return jnp.concatenate([x, dist], axis=1)


if __name__ == "__main__":
    key = jax.random.PRNGKey(0)
    N, D = 16, 32
    x = jax.random.normal(key, (N, D), dtype=jnp.float32)

    fn = jax.jit(pairwise_distance_layer)
    out = jax.block_until_ready(fn(x))

    assert out.shape == (N, D + N), out.shape
    ref = _reference(x)
    assert jnp.allclose(out, ref, atol=1e-4, rtol=1e-4), float(
        jnp.max(jnp.abs(out - ref))
    )
    print("KERNEL_OK")
</pallas_src>

<mosaic_0001>
module attributes {stable_mosaic.version = 11 : i64} {
  func.func @_dist_kernel(%arg0: i32, %arg1: i32, %arg2: i32, %arg3: memref<128x128xf32, #tpu.memory_space<vmem>>, %arg4: memref<128x128xf32, #tpu.memory_space<vmem>>, %arg5: memref<128x1xf32, #tpu.memory_space<vmem>>, %arg6: memref<1x128xf32, #tpu.memory_space<vmem>>, %arg7: memref<128x128xf32, #tpu.memory_space<vmem>>, %arg8: memref<128x128xf32, #tpu.memory_space<vmem>>) attributes {dimension_semantics = [#tpu.dimension_semantics<parallel>, #tpu.dimension_semantics<parallel>, #tpu.dimension_semantics<arbitrary>], iteration_bounds = array<i64: 1, 1, 1>, scalar_prefetch = 0 : i64, scratch_operands = 1 : i64, tpu.core_type = #tpu.core_type<tc>, window_params = [{transform_indices = @transform_0, window_bounds = array<i64: 128, 128>}, {transform_indices = @transform_1, window_bounds = array<i64: 128, 128>}, {transform_indices = @transform_2, window_bounds = array<i64: 128, 1>}, {transform_indices = @transform_3, window_bounds = array<i64: 1, 128>}, {transform_indices = @transform_4, window_bounds = array<i64: 128, 128>}]} {
    %c0_i32 = arith.constant 0 : i32
    %0 = arith.cmpi eq, %arg2, %c0_i32 : i32
    %1 = arith.cmpi eq, %arg0, %arg1 : i32
    %c0_i32_0 = arith.constant 0 : i32
    %2 = arith.cmpi eq, %arg2, %c0_i32_0 : i32
    %3 = arith.extui %2 : i1 to i32
    %c0_i32_1 = arith.constant 0 : i32
    %4 = arith.cmpi ne, %3, %c0_i32_1 : i32
    scf.if %4 {
      %cst_11 = arith.constant 0.000000e+00 : f32
      %16 = vector.broadcast %cst_11 : f32 to vector<128x128xf32>
      %c0_12 = arith.constant 0 : index
      %c0_13 = arith.constant 0 : index
      %17 = vector.load %arg8[%c0_12, %c0_13] : memref<128x128xf32, #tpu.memory_space<vmem>>, vector<128x128xf32>
      tpu.vector_store %arg8[%c0_12, %c0_13], %16 {strides = array<i32>} : memref<128x128xf32, #tpu.memory_space<vmem>>, vector<128x128xf32>,
    } else {
    }
    %c0 = arith.constant 0 : index
    %c0_2 = arith.constant 0 : index
    %5 = vector.load %arg8[%c0, %c0_2] : memref<128x128xf32, #tpu.memory_space<vmem>>, vector<128x128xf32>
    %c0_3 = arith.constant 0 : index
    %c0_4 = arith.constant 0 : index
    %6 = vector.load %arg3[%c0_3, %c0_4] : memref<128x128xf32, #tpu.memory_space<vmem>>, vector<128x128xf32>
    %c0_5 = arith.constant 0 : index
    %c0_6 = arith.constant 0 : index
    %7 = vector.load %arg4[%c0_5, %c0_6] : memref<128x128xf32, #tpu.memory_space<vmem>>, vector<128x128xf32>
    %cst = arith.constant dense<0.000000e+00> : vector<128x128xf32>
    %8 = tpu.matmul %6, %7, %cst {dimension_numbers = #tpu.dot_dimension_numbers<[1], [1], [0], [0], [0, 0, 1, 0], [], []>} : vector<128x128xf32>, vector<128x128xf32>, vector<128x128xf32> -> vector<128x128xf32>
    %9 = arith.addf %5, %8 : vector<128x128xf32>
    %c0_7 = arith.constant 0 : index
    %c0_8 = arith.constant 0 : index
    %10 = vector.load %arg8[%c0_7, %c0_8] : memref<128x128xf32, #tpu.memory_space<vmem>>, vector<128x128xf32>
    tpu.vector_store %arg8[%c0_7, %c0_8], %9 {strides = array<i32>} : memref<128x128xf32, #tpu.memory_space<vmem>>, vector<128x128xf32>,
    %11 = arith.extui %0 : i1 to i32
    %c0_i32_9 = arith.constant 0 : i32
    %12 = arith.cmpi ne, %11, %c0_i32_9 : i32
    scf.if %12 {
      %c0_11 = arith.constant 0 : index
      %c0_12 = arith.constant 0 : index
      %16 = vector.load %arg5[%c0_11, %c0_12] : memref<128x1xf32, #tpu.memory_space<vmem>>, vector<128x1xf32>
      %c0_13 = arith.constant 0 : index
      %c0_14 = arith.constant 0 : index
      %17 = vector.load %arg6[%c0_13, %c0_14] : memref<1x128xf32, #tpu.memory_space<vmem>>, vector<1x128xf32>
      %18 = vector.broadcast %16 : vector<128x1xf32> to vector<128x128xf32>
      %19 = vector.broadcast %17 : vector<1x128xf32> to vector<128x128xf32>
      %20 = arith.addf %18, %19 : vector<128x128xf32>
      %c0_15 = arith.constant 0 : index
      %c0_16 = arith.constant 0 : index
      %21 = vector.load %arg8[%c0_15, %c0_16] : memref<128x128xf32, #tpu.memory_space<vmem>>, vector<128x128xf32>
      %cst_17 = arith.constant 2.000000e+00 : f32
      %22 = vector.broadcast %cst_17 : f32 to vector<128x128xf32>
      %23 = arith.mulf %22, %21 : vector<128x128xf32>
      %24 = arith.subf %20, %23 : vector<128x128xf32>
      %cst_18 = arith.constant 0.000000e+00 : f32
      %25 = vector.broadcast %cst_18 : f32 to vector<128x128xf32>
      %26 = arith.maximumf %24, %25 : vector<128x128xf32>
      %27 = math.sqrt %26 : vector<128x128xf32>
      %c0_19 = arith.constant 0 : index
      %c0_20 = arith.constant 0 : index
      %28 = vector.load %arg7[%c0_19, %c0_20] : memref<128x128xf32, #tpu.memory_space<vmem>>, vector<128x128xf32>
      tpu.vector_store %arg7[%c0_19, %c0_20], %27 {strides = array<i32>} : memref<128x128xf32, #tpu.memory_space<vmem>>, vector<128x128xf32>,
    } else {
    }
    %13 = arith.andi %0, %1 : i1
    %14 = arith.extui %13 : i1 to i32
    %c0_i32_10 = arith.constant 0 : i32
    %15 = arith.cmpi ne, %14, %c0_i32_10 : i32
    scf.if %15 {
      %16 = tpu.iota {dimensions = array<i32: 0>} : vector<128x128xi32>
      %17 = tpu.iota {dimensions = array<i32: 1>} : vector<128x128xi32>
      %c0_11 = arith.constant 0 : index
      %c0_12 = arith.constant 0 : index
      %18 = vector.load %arg7[%c0_11, %c0_12] : memref<128x128xf32, #tpu.memory_space<vmem>>, vector<128x128xf32>
      %19 = arith.cmpi eq, %16, %17 : vector<128x128xi32>
      %cst_13 = arith.constant 0.000000e+00 : f32
      %20 = vector.broadcast %cst_13 : f32 to vector<128x128xf32>
      %21 = arith.select %19, %20, %18 : vector<128x128xi1>, vector<128x128xf32>
      %c0_14 = arith.constant 0 : index
      %c0_15 = arith.constant 0 : index
      %22 = vector.load %arg7[%c0_14, %c0_15] : memref<128x128xf32, #tpu.memory_space<vmem>>, vector<128x128xf32>
      tpu.vector_store %arg7[%c0_14, %c0_15], %21 {strides = array<i32>} : memref<128x128xf32, #tpu.memory_space<vmem>>, vector<128x128xf32>,
    } else {
    }
    return
  }
  func.func @transform_0(%arg0: i32, %arg1: i32, %arg2: i32) -> (i32, i32) {
    %c0_i32 = arith.constant 0 : i32
    return %arg0, %arg2 : i32, i32
  }
  func.func @transform_1(%arg0: i32, %arg1: i32, %arg2: i32) -> (i32, i32) {
    %c0_i32 = arith.constant 0 : i32
    return %arg1, %arg2 : i32, i32
  }
  func.func @transform_2(%arg0: i32, %arg1: i32, %arg2: i32) -> (i32, i32) {
    %c0_i32 = arith.constant 0 : i32
    %c0_i32_0 = arith.constant 0 : i32
    return %arg0, %c0_i32 : i32, i32
  }
  func.func @transform_3(%arg0: i32, %arg1: i32, %arg2: i32) -> (i32, i32) {
    %c0_i32 = arith.constant 0 : i32
    %c0_i32_0 = arith.constant 0 : i32
    return %c0_i32, %arg1 : i32, i32
  }
  func.func @transform_4(%arg0: i32, %arg1: i32, %arg2: i32) -> (i32, i32) {
    %c0_i32 = arith.constant 0 : i32
    return %arg0, %arg1 : i32, i32
  }
}

</mosaic_0001>

<llo_original>
// kernel: pairwise_distance_layer.1
$region0: #{pairwise_distance_layer.1}
  #allocation0 [shape = 'u32[]', space=smem, size = 0x4, offset = 0x4, fixed_abs, tag = 'smem constant byte address 0x4 - core index']
  #allocation1 [shape = 'u32[144,128]{1,0:T(1,128)}', space=vmem, size = 0x12000, scoped, tag = 'internal scratch']
  #allocation2 [shape = 'f32[128,128]{1,0:T(8,128)}', space=vmem, size = 0x10000, scoped, tag = 'scratch operand']
  %s0 = inlined_call_operand.vmem [shape: f32[128,128], index: 0, kind: input, shape index: {}, may-alias: {0,1}]
  %s1 = inlined_call_operand.vmem [shape: f32[128,128], index: 1, kind: input, shape index: {}, may-alias: {0,1}]
  %s2 = inlined_call_operand.vmem [shape: f32[128,1], index: 2, kind: input, shape index: {}]
  %s3 = inlined_call_operand.vmem [shape: f32[1,128], index: 3, kind: input, shape index: {}]
  %s4 = inlined_call_operand.vmem [shape: f32[16,16], index: 4, kind: output, shape index: {}]
  %s5 = sld [smem:[#allocation0]]
  $region72: #{pairwise_distance_layer.1} parent=0
    _
  %s7 = ssub.s32 1, %s5
  %s8 = scalar_select 0, %s7, %s5
  $region1: #{pairwise_distance_layer.1} parent=0
    #allocation3 [shape = 'u8[65536]{0}', space=vmem, size = 0x10000, scoped, tag = 'output window, operand 0, single buffered']
    // Predicated region
    $region2: #{pairwise_distance_layer.1} parent=1 // pred_check
      _
    $region3: #{pairwise_distance_layer.1} parent=1 // pred_check_branch
      %10 = sbr.rel (0) target = $region5
    $region4: #{pairwise_distance_layer.1} parent=1 // pred_region
      _
    $region5: #{pairwise_distance_layer.1} parent=1 // pred_fallthru
      _
    // Predicated region
    $region6: #{pairwise_distance_layer.1} parent=1 // pred_check
      _
    $region7: #{pairwise_distance_layer.1} parent=1 // pred_check_branch
      %12 = sbr.rel (0) target = $region9
    $region8: #{pairwise_distance_layer.1} parent=1 // pred_region
      _
    $region9: #{pairwise_distance_layer.1} parent=1 // pred_fallthru
      _
    // Predicated region
    $region10: #{pairwise_distance_layer.1} parent=1 // pred_check
      _
    $region11: #{pairwise_distance_layer.1} parent=1 // pred_check_branch
      %14 = sbr.rel (0) target = $region13
    $region12: #{pairwise_distance_layer.1} parent=1 // pred_region
      _
    $region13: #{pairwise_distance_layer.1} parent=1 // pred_fallthru
      _
    // Predicated region
    $region14: #{pairwise_distance_layer.1} parent=1 // pred_check
      _
    $region15: #{pairwise_distance_layer.1} parent=1 // pred_check_branch
      %16 = sbr.rel (0) target = $region17
    $region16: #{pairwise_distance_layer.1} parent=1 // pred_region
      _
    $region17: #{pairwise_distance_layer.1} parent=1 // pred_fallthru
      _
    %p17 = scmp.eq.s32.totalorder 0, 0
    %p18 = scmp.eq.s32.totalorder 0, 0
    // Predicated region
    $region18: #{pairwise_distance_layer.1} parent=1 // pred_check
      %p19 = pneg %p17
    $region19: #{pairwise_distance_layer.1} parent=1 // pred_check_branch
      %21 = sbr.rel (%p19) target = $region21
    $region20: #{pairwise_distance_layer.1} parent=1 // pred_region
      %22 = vst [vmem:[#allocation2] sm:$0xff] 0.0
      %23 = vst [vmem:[#allocation2 + $0x8] sm:$0xff] 0.0
      %24 = vst [vmem:[#allocation2 + $0x10] sm:$0xff] 0.0
      %25 = vst [vmem:[#allocation2 + $0x18] sm:$0xff] 0.0
      %26 = vst [vmem:[#allocation2 + $0x20] sm:$0xff] 0.0
      %27 = vst [vmem:[#allocation2 + $0x28] sm:$0xff] 0.0
      %28 = vst [vmem:[#allocation2 + $0x30] sm:$0xff] 0.0
      %29 = vst [vmem:[#allocation2 + $0x38] sm:$0xff] 0.0
      %30 = vst [vmem:[#allocation2 + $0x40] sm:$0xff] 0.0
      %31 = vst [vmem:[#allocation2 + $0x48] sm:$0xff] 0.0
      %32 = vst [vmem:[#allocation2 + $0x50] sm:$0xff] 0.0
      %33 = vst [vmem:[#allocation2 + $0x58] sm:$0xff] 0.0
      %34 = vst [vmem:[#allocation2 + $0x60] sm:$0xff] 0.0
      %35 = vst [vmem:[#allocation2 + $0x68] sm:$0xff] 0.0
      %36 = vst [vmem:[#allocation2 + $0x70] sm:$0xff] 0.0
      %37 = vst [vmem:[#allocation2 + $0x78] sm:$0xff] 0.0
    $region21: #{pairwise_distance_layer.1} parent=1 // pred_fallthru
      _
    %v38 = vld [vmem:[#allocation2] sm:$0xff]
    %v39 = vld [vmem:[#allocation2 + $0x8] sm:$0xff]
    %v40 = vld [vmem:[#allocation2 + $0x10] sm:$0xff]
    %v41 = vld [vmem:[#allocation2 + $0x18] sm:$0xff]
    %v42 = vld [vmem:[#allocation2 + $0x20] sm:$0xff]
    %v43 = vld [vmem:[#allocation2 + $0x28] sm:$0xff]
    %v44 = vld [vmem:[#allocation2 + $0x30] sm:$0xff]
    %v45 = vld [vmem:[#allocation2 + $0x38] sm:$0xff]
    %v46 = vld [vmem:[#allocation2 + $0x40] sm:$0xff]
    %v47 = vld [vmem:[#allocation2 + $0x48] sm:$0xff]
    %v48 = vld [vmem:[#allocation2 + $0x50] sm:$0xff]
    %v49 = vld [vmem:[#allocation2 + $0x58] sm:$0xff]
    %v50 = vld [vmem:[#allocation2 + $0x60] sm:$0xff]
    %v51 = vld [vmem:[#allocation2 + $0x68] sm:$0xff]
    %v52 = vld [vmem:[#allocation2 + $0x70] sm:$0xff]
    %v53 = vld [vmem:[#allocation2 + $0x78] sm:$0xff]
    %v54 = vld [vmem:[%s0] sm:$0xff]
    %v55 = vld [vmem:[%s0 + $0x8] sm:$0xff]
    %v56 = vld [vmem:[%s0 + $0x10] sm:$0xff]
    %v57 = vld [vmem:[%s0 + $0x18] sm:$0xff]
    %v58 = vld [vmem:[%s0 + $0x20] sm:$0xff]
    %v59 = vld [vmem:[%s0 + $0x28] sm:$0xff]
    %v60 = vld [vmem:[%s0 + $0x30] sm:$0xff]
    %v61 = vld [vmem:[%s0 + $0x38] sm:$0xff]
    %v62 = vld [vmem:[%s0 + $0x40] sm:$0xff]
    %v63 = vld [vmem:[%s0 + $0x48] sm:$0xff]
    %v64 = vld [vmem:[%s0 + $0x50] sm:$0xff]
    %v65 = vld [vmem:[%s0 + $0x58] sm:$0xff]
    %v66 = vld [vmem:[%s0 + $0x60] sm:$0xff]
    %v67 = vld [vmem:[%s0 + $0x68] sm:$0xff]
    %v68 = vld [vmem:[%s0 + $0x70] sm:$0xff]
    %v69 = vld [vmem:[%s0 + $0x78] sm:$0xff]
    %v70 = vld [vmem:[%s1] sm:$0xff]
    %v71 = vld [vmem:[%s1 + $0x8] sm:$0xff]
    %v72 = vld [vmem:[%s1 + $0x10] sm:$0xff]
    %v73 = vld [vmem:[%s1 + $0x18] sm:$0xff]
    %v74 = vld [vmem:[%s1 + $0x20] sm:$0xff]
    %v75 = vld [vmem:[%s1 + $0x28] sm:$0xff]
    %v76 = vld [vmem:[%s1 + $0x30] sm:$0xff]
    %v77 = vld [vmem:[%s1 + $0x38] sm:$0xff]
    %v78 = vld [vmem:[%s1 + $0x40] sm:$0xff]
    %v79 = vld [vmem:[%s1 + $0x48] sm:$0xff]
    %v80 = vld [vmem:[%s1 + $0x50] sm:$0xff]
    %v81 = vld [vmem:[%s1 + $0x58] sm:$0xff]
    %v82 = vld [vmem:[%s1 + $0x60] sm:$0xff]
    %v83 = vld [vmem:[%s1 + $0x68] sm:$0xff]
    %v84 = vld [vmem:[%s1 + $0x70] sm:$0xff]
    %v85 = vld [vmem:[%s1 + $0x78] sm:$0xff]
    %86 = vmatprep.subr.mxu0 0.0
    %87 = vmatpush1.xpose.msra.mxu0 %v85
    %88 = vmatprep.subr.mxu0 0.0
    %89 = vmatpush1.xpose.msra.mxu0 %v84
    %90 = vmatprep.subr.mxu0 0.0
    %91 = vmatpush1.xpose.msra.mxu0 %v83
    %92 = vmatprep.subr.mxu0 0.0
    %93 = vmatpush1.xpose.msra.mxu0 %v82
    %94 = vmatprep.subr.mxu0 0.0
    %95 = vmatpush1.xpose.msra.mxu0 %v81
    %96 = vmatprep.subr.mxu0 0.0
    %97 = vmatpush1.xpose.msra.mxu0 %v80
    %98 = vmatprep.subr.mxu0 0.0
    %99 = vmatpush1.xpose.msra.mxu0 %v79
    %100 = vmatprep.subr.mxu0 0.0
    %101 = vmatpush1.xpose.msra.mxu0 %v78
    %102 = vmatprep.subr.mxu0 0.0
    %103 = vmatpush1.xpose.msra.mxu0 %v77
    %104 = vmatprep.subr.mxu0 0.0
    %105 = vmatpush1.xpose.msra.mxu0 %v76
    %106 = vmatprep.subr.mxu0 0.0
    %107 = vmatpush1.xpose.msra.mxu0 %v75
    %108 = vmatprep.subr.mxu0 0.0
    %109 = vmatpush1.xpose.msra.mxu0 %v74
    %110 = vmatprep.subr.mxu0 0.0
    %111 = vmatpush1.xpose.msra.mxu0 %v73
    %112 = vmatprep.subr.mxu0 0.0
    %113 = vmatpush1.xpose.msra.mxu0 %v72
    %114 = vmatprep.subr.mxu0 0.0
    %115 = vmatpush1.xpose.msra.mxu0 %v71
    %116 = vmatprep.subr.mxu0 0.0
    %117 = vmatpush1.xpose.msra.mxu0 %v70
    %118 = vmatprep.subr.mxu0 0.0
    %119 = vmatpush2.xpose.msra.mxu0 0.0
    %120 = vmatprep.subr.mxu0 0.0
    %121 = vmatpush2.xpose.msra.mxu0 0.0
    %122 = vmatprep.subr.mxu0 0.0
    %123 = vmatpush2.xpose.msra.mxu0 0.0
    %124 = vmatprep.subr.mxu0 0.0
    %125 = vmatpush2.xpose.msra.mxu0 0.0
    %126 = vmatprep.subr.mxu0 0.0
    %127 = vmatpush2.xpose.msra.mxu0 0.0
    %128 = vmatprep.subr.mxu0 0.0
    %129 = vmatpush2.xpose.msra.mxu0 0.0
    %130 = vmatprep.subr.mxu0 0.0
    %131 = vmatpush2.xpose.msra.mxu0 0.0
    %132 = vmatprep.subr.mxu0 0.0
    %133 = vmatpush2.xpose.msra.mxu0 0.0
    %134 = vmatprep.subr.mxu0 0.0
    %135 = vmatpush2.xpose.msra.mxu0 0.0
    %136 = vmatprep.subr.mxu0 0.0
    %137 = vmatpush2.xpose.msra.mxu0 0.0
    %138 = vmatprep.subr.mxu0 0.0
    %139 = vmatpush2.xpose.msra.mxu0 0.0
    %140 = vmatprep.subr.mxu0 0.0
    %141 = vmatpush2.xpose.msra.mxu0 0.0
    %142 = vmatprep.subr.mxu0 0.0
    %143 = vmatpush2.xpose.msra.mxu0 0.0
    %144 = vmatprep.subr.mxu0 0.0
    %145 = vmatpush2.xpose.msra.mxu0 0.0
    %146 = vmatprep.subr.mxu0 0.0
    %147 = vmatpush2.xpose.msra.mxu0 0.0
    %148 = vmatprep.subr.mxu0 0.0
    %149 = vmatpush2.xpose.msra.mxu0 0.0
    %150 = vmatprep.mubr.f32.mxu0 0.0
    %151 = vmatmul.mubr.f32.gmra.mxu0 %v54
    %v152 = vpop.f32.mrf.mxu0
    %v153 = vadd.f32 0.0, %v152
    %v154 = vpop.f32.mrf.mxu0
    %155 = vmatprep.mubr.f32.mxu0 0.0
    %156 = vmatmul.mubr.f32.gmra.mxu0 %v55
    %v157 = vpop.f32.mrf.mxu0
    %v158 = vadd.f32 0.0, %v157
    %v159 = vpop.f32.mrf.mxu0
    %160 = vmatprep.mubr.f32.mxu0 0.0
    %161 = vmatmul.mubr.f32.gmra.mxu0 %v56
    %v162 = vpop.f32.mrf.mxu0
    %v163 = vadd.f32 0.0, %v162
    %v164 = vpop.f32.mrf.mxu0
    %165 = vmatprep.mubr.f32.mxu0 0.0
    %166 = vmatmul.mubr.f32.gmra.mxu0 %v57
    %v167 = vpop.f32.mrf.mxu0
    %v168 = vadd.f32 0.0, %v167
    %v169 = vpop.f32.mrf.mxu0
    %170 = vmatprep.mubr.f32.mxu0 0.0
    %171 = vmatmul.mubr.f32.gmra.mxu0 %v58
    %v172 = vpop.f32.mrf.mxu0
    %v173 = vadd.f32 0.0, %v172
    %v174 = vpop.f32.mrf.mxu0
    %175 = vmatprep.mubr.f32.mxu0 0.0
    %176 = vmatmul.mubr.f32.gmra.mxu0 %v59
    %v177 = vpop.f32.mrf.mxu0
    %v178 = vadd.f32 0.0, %v177
    %v179 = vpop.f32.mrf.mxu0
    %180 = vmatprep.mubr.f32.mxu0 0.0
    %181 = vmatmul.mubr.f32.gmra.mxu0 %v60
    %v182 = vpop.f32.mrf.mxu0
    %v183 = vadd.f32 0.0, %v182
    %v184 = vpop.f32.mrf.mxu0
    %185 = vmatprep.mubr.f32.mxu0 0.0
    %186 = vmatmul.mubr.f32.gmra.mxu0 %v61
    %v187 = vpop.f32.mrf.mxu0
    %v188 = vadd.f32 0.0, %v187
    %v189 = vpop.f32.mrf.mxu0
    %190 = vmatprep.mubr.f32.mxu0 0.0
    %191 = vmatmul.mubr.f32.gmra.mxu0 %v62
    %v192 = vpop.f32.mrf.mxu0
    %v193 = vadd.f32 0.0, %v192
    %v194 = vpop.f32.mrf.mxu0
    %195 = vmatprep.mubr.f32.mxu0 0.0
    %196 = vmatmul.mubr.f32.gmra.mxu0 %v63
    %v197 = vpop.f32.mrf.mxu0
    %v198 = vadd.f32 0.0, %v197
    %v199 = vpop.f32.mrf.mxu0
    %200 = vmatprep.mubr.f32.mxu0 0.0
    %201 = vmatmul.mubr.f32.gmra.mxu0 %v64
    %v202 = vpop.f32.mrf.mxu0
    %v203 = vadd.f32 0.0, %v202
    %v204 = vpop.f32.mrf.mxu0
    %205 = vmatprep.mubr.f32.mxu0 0.0
    %206 = vmatmul.mubr.f32.gmra.mxu0 %v65
    %v207 = vpop.f32.mrf.mxu0
    %v208 = vadd.f32 0.0, %v207
    %v209 = vpop.f32.mrf.mxu0
    %210 = vmatprep.mubr.f32.mxu0 0.0
    %211 = vmatmul.mubr.f32.gmra.mxu0 %v66
    %v212 = vpop.f32.mrf.mxu0
    %v213 = vadd.f32 0.0, %v212
    %v214 = vpop.f32.mrf.mxu0
    %215 = vmatprep.mubr.f32.mxu0 0.0
    %216 = vmatmul.mubr.f32.gmra.mxu0 %v67
    %v217 = vpop.f32.mrf.mxu0
    %v218 = vadd.f32 0.0, %v217
    %v219 = vpop.f32.mrf.mxu0
    %220 = vmatprep.mubr.f32.mxu0 0.0
    %221 = vmatmul.mubr.f32.gmra.mxu0 %v68
    %v222 = vpop.f32.mrf.mxu0
    %v223 = vadd.f32 0.0, %v222
    %v224 = vpop.f32.mrf.mxu0
    %225 = vmatprep.mubr.f32.mxu0 0.0
    %226 = vmatmul.mubr.f32.gmra.mxu0 %v69
    %v227 = vpop.f32.mrf.mxu0
    %v228 = vadd.f32 0.0, %v227
    %v229 = vpop.f32.mrf.mxu0
    %230 = vdwg.mxu0
    %v231 = vadd.f32 %v38, %v153
    %v232 = vadd.f32 %v39, %v158
    %v233 = vadd.f32 %v40, %v163
    %v234 = vadd.f32 %v41, %v168
    %v235 = vadd.f32 %v42, %v173
    %v236 = vadd.f32 %v43, %v178
    %v237 = vadd.f32 %v44, %v183
    %v238 = vadd.f32 %v45, %v188
    %v239 = vadd.f32 %v46, %v193
    %v240 = vadd.f32 %v47, %v198
    %v241 = vadd.f32 %v48, %v203
    %v242 = vadd.f32 %v49, %v208
    %v243 = vadd.f32 %v50, %v213
    %v244 = vadd.f32 %v51, %v218
    %v245 = vadd.f32 %v52, %v223
    %v246 = vadd.f32 %v53, %v228
    %247 = vst [vmem:[#allocation2] sm:$0xff] %v231
    %248 = vst [vmem:[#allocation2 + $0x8] sm:$0xff] %v232
    %249 = vst [vmem:[#allocation2 + $0x10] sm:$0xff] %v233
    %250 = vst [vmem:[#allocation2 + $0x18] sm:$0xff] %v234
    %251 = vst [vmem:[#allocation2 + $0x20] sm:$0xff] %v235
    %252 = vst [vmem:[#allocation2 + $0x28] sm:$0xff] %v236
    %253 = vst [vmem:[#allocation2 + $0x30] sm:$0xff] %v237
    %254 = vst [vmem:[#allocation2 + $0x38] sm:$0xff] %v238
    %255 = vst [vmem:[#allocation2 + $0x40] sm:$0xff] %v239
    %256 = vst [vmem:[#allocation2 + $0x48] sm:$0xff] %v240
    %257 = vst [vmem:[#allocation2 + $0x50] sm:$0xff] %v241
    %258 = vst [vmem:[#allocation2 + $0x58] sm:$0xff] %v242
    %259 = vst [vmem:[#allocation2 + $0x60] sm:$0xff] %v243
    %260 = vst [vmem:[#allocation2 + $0x68] sm:$0xff] %v244
    %261 = vst [vmem:[#allocation2 + $0x70] sm:$0xff] %v245
    %262 = vst [vmem:[#allocation2 + $0x78] sm:$0xff] %v246
    // Predicated region
    $region22: #{pairwise_distance_layer.1} parent=1 // pred_check
      %p263 = pneg %p17
    $region23: #{pairwise_distance_layer.1} parent=1 // pred_check_branch
      %265 = sbr.rel (%p263) target = $region25
    $region24: #{pairwise_distance_layer.1} parent=1 // pred_region
      %v266 = vld [vmem:[%s2] sm:$0xff]
      %v267 = vld [vmem:[%s2 + $0x8] sm:$0xff]
      %v268 = vld [vmem:[%s2 + $0x10] sm:$0xff]
      %v269 = vld [vmem:[%s2 + $0x18] sm:$0xff]
      %v270 = vld [vmem:[%s2 + $0x20] sm:$0xff]
      %v271 = vld [vmem:[%s2 + $0x28] sm:$0xff]
      %v272 = vld [vmem:[%s2 + $0x30] sm:$0xff]
      %v273 = vld [vmem:[%s2 + $0x38] sm:$0xff]
      %v274 = vld [vmem:[%s2 + $0x40] sm:$0xff]
      %v275 = vld [vmem:[%s2 + $0x48] sm:$0xff]
      %v276 = vld [vmem:[%s2 + $0x50] sm:$0xff]
      %v277 = vld [vmem:[%s2 + $0x58] sm:$0xff]
      %v278 = vld [vmem:[%s2 + $0x60] sm:$0xff]
      %v279 = vld [vmem:[%s2 + $0x68] sm:$0xff]
      %v280 = vld [vmem:[%s2 + $0x70] sm:$0xff]
      %v281 = vld [vmem:[%s2 + $0x78] sm:$0xff]
      %v282 = vld [vmem:[%s3] sm:$0x1]
      %284 = vset.pattern.permute.xlu0 0
      %285 = vperm.xlu0 %284, %v266
      %v286 = vpop.permute.xlu0 %285
      %289 = vset.pattern.permute.xlu0 0
      %290 = vperm.xlu0 %289, %v267
      %v291 = vpop.permute.xlu0 %290
      %294 = vset.pattern.permute.xlu0 0
      %295 = vperm.xlu0 %294, %v268
      %v296 = vpop.permute.xlu0 %295
      %299 = vset.pattern.permute.xlu0 0
      %300 = vperm.xlu0 %299, %v269
      %v301 = vpop.permute.xlu0 %300
      %304 = vset.pattern.permute.xlu0 0
      %305 = vperm.xlu0 %304, %v270
      %v306 = vpop.permute.xlu0 %305
      %309 = vset.pattern.permute.xlu0 0
      %310 = vperm.xlu0 %309, %v271
      %v311 = vpop.permute.xlu0 %310
      %314 = vset.pattern.permute.xlu0 0
      %315 = vperm.xlu0 %314, %v272
      %v316 = vpop.permute.xlu0 %315
      %319 = vset.pattern.permute.xlu0 0
      %320 = vperm.xlu0 %319, %v273
      %v321 = vpop.permute.xlu0 %320
      %324 = vset.pattern.permute.xlu0 0
      %325 = vperm.xlu0 %324, %v274
      %v326 = vpop.permute.xlu0 %325
      %329 = vset.pattern.permute.xlu0 0
      %330 = vperm.xlu0 %329, %v275
      %v331 = vpop.permute.xlu0 %330
      %334 = vset.pattern.permute.xlu0 0
      %335 = vperm.xlu0 %334, %v276
      %v336 = vpop.permute.xlu0 %335
      %339 = vset.pattern.permute.xlu0 0
      %340 = vperm.xlu0 %339, %v277
      %v341 = vpop.permute.xlu0 %340
      %344 = vset.pattern.permute.xlu0 0
      %345 = vperm.xlu0 %344, %v278
      %v346 = vpop.permute.xlu0 %345
      %349 = vset.pattern.permute.xlu0 0
      %350 = vperm.xlu0 %349, %v279
      %v351 = vpop.permute.xlu0 %350
      %354 = vset.pattern.permute.xlu0 0
      %355 = vperm.xlu0 %354, %v280
      %v356 = vpop.permute.xlu0 %355
      %359 = vset.pattern.permute.xlu0 0
      %360 = vperm.xlu0 %359, %v281
      %v361 = vpop.permute.xlu0 %360
      %v364 = vlaneseq
      %v365 = vshrl.u32 %v364, 7
      %v366 = vsub.s32 0, %v365
      %v367 = vrot.slane %v282, %v366
      %v369 = vadd.f32 %v286, %v367
      %v370 = vadd.f32 %v291, %v367
      %v371 = vadd.f32 %v296, %v367
      %v372 = vadd.f32 %v301, %v367
      %v373 = vadd.f32 %v306, %v367
      %v374 = vadd.f32 %v311, %v367
      %v375 = vadd.f32 %v316, %v367
      %v376 = vadd.f32 %v321, %v367
      %v377 = vadd.f32 %v326, %v367
      %v378 = vadd.f32 %v331, %v367
      %v379 = vadd.f32 %v336, %v367
      %v380 = vadd.f32 %v341, %v367
      %v381 = vadd.f32 %v346, %v367
      %v382 = vadd.f32 %v351, %v367
      %v383 = vadd.f32 %v356, %v367
      %v384 = vadd.f32 %v361, %v367
      %v385 = vld [vmem:[#allocation2] sm:$0xff]
      %v386 = vld [vmem:[#allocation2 + $0x8] sm:$0xff]
      %v387 = vld [vmem:[#allocation2 + $0x10] sm:$0xff]
      %v388 = vld [vmem:[#allocation2 + $0x18] sm:$0xff]
      %v389 = vld [vmem:[#allocation2 + $0x20] sm:$0xff]
      %v390 = vld [vmem:[#allocation2 + $0x28] sm:$0xff]
      %v391 = vld [vmem:[#allocation2 + $0x30] sm:$0xff]
      %v392 = vld [vmem:[#allocation2 + $0x38] sm:$0xff]
      %v393 = vld [vmem:[#allocation2 + $0x40] sm:$0xff]
      %v394 = vld [vmem:[#allocation2 + $0x48] sm:$0xff]
      %v395 = vld [vmem:[#allocation2 + $0x50] sm:$0xff]
      %v396 = vld [vmem:[#allocation2 + $0x58] sm:$0xff]
      %v397 = vld [vmem:[#allocation2 + $0x60] sm:$0xff]
      %v398 = vld [vmem:[#allocation2 + $0x68] sm:$0xff]
      %v399 = vld [vmem:[#allocation2 + $0x70] sm:$0xff]
      %v400 = vld [vmem:[#allocation2 + $0x78] sm:$0xff]
      %v401 = vmul.f32 %v385, 2.0
      %v402 = vmul.f32 %v386, 2.0
      %v403 = vmul.f32 %v387, 2.0
      %v404 = vmul.f32 %v388, 2.0
      %v405 = vmul.f32 %v389, 2.0
      %v406 = vmul.f32 %v390, 2.0
      %v407 = vmul.f32 %v391, 2.0
      %v408 = vmul.f32 %v392, 2.0
      %v409 = vmul.f32 %v393, 2.0
      %v410 = vmul.f32 %v394, 2.0
      %v411 = vmul.f32 %v395, 2.0
      %v412 = vmul.f32 %v396, 2.0
      %v413 = vmul.f32 %v397, 2.0
      %v414 = vmul.f32 %v398, 2.0
      %v415 = vmul.f32 %v399, 2.0
      %v416 = vmul.f32 %v400, 2.0
      %v417 = vsub.f32 %v369, %v401
      %v418 = vsub.f32 %v370, %v402
      %v419 = vsub.f32 %v371, %v403
      %v420 = vsub.f32 %v372, %v404
      %v421 = vsub.f32 %v373, %v405
      %v422 = vsub.f32 %v374, %v406
      %v423 = vsub.f32 %v375, %v407
      %v424 = vsub.f32 %v376, %v408
      %v425 = vsub.f32 %v377, %v409
      %v426 = vsub.f32 %v378, %v410
      %v427 = vsub.f32 %v379, %v411
      %v428 = vsub.f32 %v380, %v412
      %v429 = vsub.f32 %v381, %v413
      %v430 = vsub.f32 %v382, %v414
      %v431 = vsub.f32 %v383, %v415
      %v432 = vsub.f32 %v384, %v416
      %v433 = vmax.f32 %v417, 0.0
      %v434 = vmax.f32 %v418, 0.0
      %v435 = vmax.f32 %v419, 0.0
      %v436 = vmax.f32 %v420, 0.0
      %v437 = vmax.f32 %v421, 0.0
      %v438 = vmax.f32 %v422, 0.0
      %v439 = vmax.f32 %v423, 0.0
      %v440 = vmax.f32 %v424, 0.0
      %v441 = vmax.f32 %v425, 0.0
      %v442 = vmax.f32 %v426, 0.0
      %v443 = vmax.f32 %v427, 0.0
      %v444 = vmax.f32 %v428, 0.0
      %v445 = vmax.f32 %v429, 0.0
      %v446 = vmax.f32 %v430, 0.0
      %v447 = vmax.f32 %v431, 0.0
      %v448 = vmax.f32 %v432, 0.0
      %v449 = vrsqrt.pop %v433
      %v450 = vmul.f32 %v433, %v449
      %vm451 = vcmp.eq.f32.partialorder %v433, inf
      %v452 = vsel %vm451, %v433, %v450
      %vm453 = vcmp.eq.f32.partialorder %v433, 0.0
      %v454 = vand.u32 %v433, 2147483648
      %v455 = vsel %vm453, %v454, %v452
      %v456 = vrsqrt.pop %v434
      %v457 = vmul.f32 %v434, %v456
      %vm458 = vcmp.eq.f32.partialorder %v434, inf
      %v459 = vsel %vm458, %v434, %v457
      %vm460 = vcmp.eq.f32.partialorder %v434, 0.0
      %v461 = vand.u32 %v434, 2147483648
      %v462 = vsel %vm460, %v461, %v459
      %v463 = vrsqrt.pop %v435
      %v464 = vmul.f32 %v435, %v463
      %vm465 = vcmp.eq.f32.partialorder %v435, inf
      %v466 = vsel %vm465, %v435, %v464
      %vm467 = vcmp.eq.f32.partialorder %v435, 0.0
      %v468 = vand.u32 %v435, 2147483648
      %v469 = vsel %vm467, %v468, %v466
      %v470 = vrsqrt.pop %v436
      %v471 = vmul.f32 %v436, %v470
      %vm472 = vcmp.eq.f32.partialorder %v436, inf
      %v473 = vsel %vm472, %v436, %v471
      %vm474 = vcmp.eq.f32.partialorder %v436, 0.0
      %v475 = vand.u32 %v436, 2147483648
      %v476 = vsel %vm474, %v475, %v473
      %v477 = vrsqrt.pop %v437
      %v478 = vmul.f32 %v437, %v477
      %vm479 = vcmp.eq.f32.partialorder %v437, inf
      %v480 = vsel %vm479, %v437, %v478
      %vm481 = vcmp.eq.f32.partialorder %v437, 0.0
      %v482 = vand.u32 %v437, 2147483648
      %v483 = vsel %vm481, %v482, %v480
      %v484 = vrsqrt.pop %v438
      %v485 = vmul.f32 %v438, %v484
      %vm486 = vcmp.eq.f32.partialorder %v438, inf
      %v487 = vsel %vm486, %v438, %v485
      %vm488 = vcmp.eq.f32.partialorder %v438, 0.0
      %v489 = vand.u32 %v438, 2147483648
      %v490 = vsel %vm488, %v489, %v487
      %v491 = vrsqrt.pop %v439
      %v492 = vmul.f32 %v439, %v491
      %vm493 = vcmp.eq.f32.partialorder %v439, inf
      %v494 = vsel %vm493, %v439, %v492
      %vm495 = vcmp.eq.f32.partialorder %v439, 0.0
      %v496 = vand.u32 %v439, 2147483648
      %v497 = vsel %vm495, %v496, %v494
      %v498 = vrsqrt.pop %v440
      %v499 = vmul.f32 %v440, %v498
      %vm500 = vcmp.eq.f32.partialorder %v440, inf
      %v501 = vsel %vm500, %v440, %v499
      %vm502 = vcmp.eq.f32.partialorder %v440, 0.0
      %v503 = vand.u32 %v440, 2147483648
      %v504 = vsel %vm502, %v503, %v501
      %v505 = vrsqrt.pop %v441
      %v506 = vmul.f32 %v441, %v505
      %vm507 = vcmp.eq.f32.partialorder %v441, inf
      %v508 = vsel %vm507, %v441, %v506
      %vm509 = vcmp.eq.f32.partialorder %v441, 0.0
      %v510 = vand.u32 %v441, 2147483648
      %v511 = vsel %vm509, %v510, %v508
      %v512 = vrsqrt.pop %v442
      %v513 = vmul.f32 %v442, %v512
      %vm514 = vcmp.eq.f32.partialorder %v442, inf
      %v515 = vsel %vm514, %v442, %v513
      %vm516 = vcmp.eq.f32.partialorder %v442, 0.0
      %v517 = vand.u32 %v442, 2147483648
      %v518 = vsel %vm516, %v517, %v515
      %v519 = vrsqrt.pop %v443
      %v520 = vmul.f32 %v443, %v519
      %vm521 = vcmp.eq.f32.partialorder %v443, inf
      %v522 = vsel %vm521, %v443, %v520
      %vm523 = vcmp.eq.f32.partialorder %v443, 0.0
      %v524 = vand.u32 %v443, 2147483648
      %v525 = vsel %vm523, %v524, %v522
      %v526 = vrsqrt.pop %v444
      %v527 = vmul.f32 %v444, %v526
      %vm528 = vcmp.eq.f32.partialorder %v444, inf
      %v529 = vsel %vm528, %v444, %v527
      %vm530 = vcmp.eq.f32.partialorder %v444, 0.0
      %v531 = vand.u32 %v444, 2147483648
      %v532 = vsel %vm530, %v531, %v529
      %v533 = vrsqrt.pop %v445
      %v534 = vmul.f32 %v445, %v533
      %vm535 = vcmp.eq.f32.partialorder %v445, inf
      %v536 = vsel %vm535, %v445, %v534
      %vm537 = vcmp.eq.f32.partialorder %v445, 0.0
      %v538 = vand.u32 %v445, 2147483648
      %v539 = vsel %vm537, %v538, %v536
      %v540 = vrsqrt.pop %v446
      %v541 = vmul.f32 %v446, %v540
      %vm542 = vcmp.eq.f32.partialorder %v446, inf
      %v543 = vsel %vm542, %v446, %v541
      %vm544 = vcmp.eq.f32.partialorder %v446, 0.0
      %v545 = vand.u32 %v446, 2147483648
      %v546 = vsel %vm544, %v545, %v543
      %v547 = vrsqrt.pop %v447
      %v548 = vmul.f32 %v447, %v547
      %vm549 = vcmp.eq.f32.partialorder %v447, inf
      %v550 = vsel %vm549, %v447, %v548
      %vm551 = vcmp.eq.f32.partialorder %v447, 0.0
      %v552 = vand.u32 %v447, 2147483648
      %v553 = vsel %vm551, %v552, %v550
      %v554 = vrsqrt.pop %v448
      %v555 = vmul.f32 %v448, %v554
      %vm556 = vcmp.eq.f32.partialorder %v448, inf
      %v557 = vsel %vm556, %v448, %v555
      %vm558 = vcmp.eq.f32.partialorder %v448, 0.0
      %v559 = vand.u32 %v448, 2147483648
      %v560 = vsel %vm558, %v559, %v557
      %561 = vst [vmem:[#allocation3] sm:$0xff] %v455
      %562 = vst [vmem:[#allocation3 + $0x8] sm:$0xff] %v462
      %563 = vst [vmem:[#allocation3 + $0x10] sm:$0xff] %v469
      %564 = vst [vmem:[#allocation3 + $0x18] sm:$0xff] %v476
      %565 = vst [vmem:[#allocation3 + $0x20] sm:$0xff] %v483
      %566 = vst [vmem:[#allocation3 + $0x28] sm:$0xff] %v490
      %567 = vst [vmem:[#allocation3 + $0x30] sm:$0xff] %v497
      %568 = vst [vmem:[#allocation3 + $0x38] sm:$0xff] %v504
      %569 = vst [vmem:[#allocation3 + $0x40] sm:$0xff] %v511
      %570 = vst [vmem:[#allocation3 + $0x48] sm:$0xff] %v518
      %571 = vst [vmem:[#allocation3 + $0x50] sm:$0xff] %v525
      %572 = vst [vmem:[#allocation3 + $0x58] sm:$0xff] %v532
      %573 = vst [vmem:[#allocation3 + $0x60] sm:$0xff] %v539
      %574 = vst [vmem:[#allocation3 + $0x68] sm:$0xff] %v546
      %575 = vst [vmem:[#allocation3 + $0x70] sm:$0xff] %v553
      %576 = vst [vmem:[#allocation3 + $0x78] sm:$0xff] %v560
    $region25: #{pairwise_distance_layer.1} parent=1 // pred_fallthru
      _
    %p577 = pnand %p17, %p18
    %p578 = pneg %p577
    // Predicated region
    $region26: #{pairwise_distance_layer.1} parent=1 // pred_check
      _
    $region27: #{pairwise_distance_layer.1} parent=1 // pred_check_branch
      %580 = sbr.rel (%p577) target = $region29
    $region28: #{pairwise_distance_layer.1} parent=1 // pred_region
      %v581 = vlaneseq
      %v582 = vshrl.u32 %v581, 7
      %v583 = vadd.s32 %v582, 8
      %v584 = vadd.s32 %v582, 16
      %v585 = vadd.s32 %v582, 24
      %v586 = vadd.s32 %v582, 32
      %v587 = vadd.s32 %v582, 40
      %v588 = vadd.s32 %v582, 48
      %v589 = vadd.s32 %v582, 56
      %v590 = vadd.s32 %v582, 64
      %v591 = vadd.s32 %v582, 72
      %v592 = vadd.s32 %v582, 80
      %v593 = vadd.s32 %v582, 88
      %v594 = vadd.s32 %v582, 96
      %v595 = vadd.s32 %v582, 104
      %v596 = vadd.s32 %v582, 112
      %v597 = vadd.s32 %v582, 120
      %v598 = vlaneseq
      %v599 = vand.u32 %v598, 127
      %v600 = vld [vmem:[#allocation3] sm:$0xff]
      %v601 = vld [vmem:[#allocation3 + $0x8] sm:$0xff]
      %v602 = vld [vmem:[#allocation3 + $0x10] sm:$0xff]
      %v603 = vld [vmem:[#allocation3 + $0x18] sm:$0xff]
      %v604 = vld [vmem:[#allocation3 + $0x20] sm:$0xff]
      %v605 = vld [vmem:[#allocation3 + $0x28] sm:$0xff]
      %v606 = vld [vmem:[#allocation3 + $0x30] sm:$0xff]
      %v607 = vld [vmem:[#allocation3 + $0x38] sm:$0xff]
      %v608 = vld [vmem:[#allocation3 + $0x40] sm:$0xff]
      %v609 = vld [vmem:[#allocation3 + $0x48] sm:$0xff]
      %v610 = vld [vmem:[#allocation3 + $0x50] sm:$0xff]
      %v611 = vld [vmem:[#allocation3 + $0x58] sm:$0xff]
      %v612 = vld [vmem:[#allocation3 + $0x60] sm:$0xff]
      %v613 = vld [vmem:[#allocation3 + $0x68] sm:$0xff]
      %v614 = vld [vmem:[#allocation3 + $0x70] sm:$0xff]
      %v615 = vld [vmem:[#allocation3 + $0x78] sm:$0xff]
      %vm616 = vcmp.eq.s32.totalorder %v582, %v599
      %vm617 = vcmp.eq.s32.totalorder %v583, %v599
      %vm618 = vcmp.eq.s32.totalorder %v584, %v599
      %vm619 = vcmp.eq.s32.totalorder %v585, %v599
      %vm620 = vcmp.eq.s32.totalorder %v586, %v599
      %vm621 = vcmp.eq.s32.totalorder %v587, %v599
      %vm622 = vcmp.eq.s32.totalorder %v588, %v599
      %vm623 = vcmp.eq.s32.totalorder %v589, %v599
      %vm624 = vcmp.eq.s32.totalorder %v590, %v599
      %vm625 = vcmp.eq.s32.totalorder %v591, %v599
      %vm626 = vcmp.eq.s32.totalorder %v592, %v599
      %vm627 = vcmp.eq.s32.totalorder %v593, %v599
      %vm628 = vcmp.eq.s32.totalorder %v594, %v599
      %vm629 = vcmp.eq.s32.totalorder %v595, %v599
      %vm630 = vcmp.eq.s32.totalorder %v596, %v599
      %vm631 = vcmp.eq.s32.totalorder %v597, %v599
      %v632 = vsel %vm616, 0.0, %v600
      %v633 = vsel %vm617, 0.0, %v601
      %v634 = vsel %vm618, 0.0, %v602
      %v635 = vsel %vm619, 0.0, %v603
      %v636 = vsel %vm620, 0.0, %v604
      %v637 = vsel %vm621, 0.0, %v605
      %v638 = vsel %vm622, 0.0, %v606
      %v639 = vsel %vm623, 0.0, %v607
      %v640 = vsel %vm624, 0.0, %v608
      %v641 = vsel %vm625, 0.0, %v609
      %v642 = vsel %vm626, 0.0, %v610
      %v643 = vsel %vm627, 0.0, %v611
      %v644 = vsel %vm628, 0.0, %v612
      %v645 = vsel %vm629, 0.0, %v613
      %v646 = vsel %vm630, 0.0, %v614
      %v647 = vsel %vm631, 0.0, %v615
      %648 = vst [vmem:[#allocation3] sm:$0xff] %v632
      %649 = vst [vmem:[#allocation3 + $0x8] sm:$0xff] %v633
      %650 = vst [vmem:[#allocation3 + $0x10] sm:$0xff] %v634
      %651 = vst [vmem:[#allocation3 + $0x18] sm:$0xff] %v635
      %652 = vst [vmem:[#allocation3 + $0x20] sm:$0xff] %v636
      %653 = vst [vmem:[#allocation3 + $0x28] sm:$0xff] %v637
      %654 = vst [vmem:[#allocation3 + $0x30] sm:$0xff] %v638
      %655 = vst [vmem:[#allocation3 + $0x38] sm:$0xff] %v639
      %656 = vst [vmem:[#allocation3 + $0x40] sm:$0xff] %v640
      %657 = vst [vmem:[#allocation3 + $0x48] sm:$0xff] %v641
      %658 = vst [vmem:[#allocation3 + $0x50] sm:$0xff] %v642
      %659 = vst [vmem:[#allocation3 + $0x58] sm:$0xff] %v643
      %660 = vst [vmem:[#allocation3 + $0x60] sm:$0xff] %v644
      %661 = vst [vmem:[#allocation3 + $0x68] sm:$0xff] %v645
      %662 = vst [vmem:[#allocation3 + $0x70] sm:$0xff] %v646
      %663 = vst [vmem:[#allocation3 + $0x78] sm:$0xff] %v647
    $region29: #{pairwise_distance_layer.1} parent=1 // pred_fallthru
      _
    // Predicated region
    $region30: #{pairwise_distance_layer.1} parent=1 // pred_check
      _
    $region31: #{pairwise_distance_layer.1} parent=1 // pred_check_branch
      %665 = sbr.rel (0) target = $region33
    $region32: #{pairwise_distance_layer.1} parent=1 // pred_region
      // Predicated region
      $region34: #{pairwise_distance_layer.1} parent=32 // pred_check
        _
      $region35: #{pairwise_distance_layer.1} parent=32 // pred_check_branch
        %667 = sbr.rel (0) target = $region37
      $region36: #{pairwise_distance_layer.1} parent=32 // pred_region
        // Predicated region
        $region38: #{pairwise_distance_layer.1} parent=36 // pred_check
          _
        $region39: #{pairwise_distance_layer.1} parent=36 // pred_check_branch
          %669 = sbr.rel (0) target = $region41
        $region40: #{pairwise_distance_layer.1} parent=36 // pred_region
          // Predicated region
          $region53: #{pairwise_distance_layer.1} parent=40 // pred_check
            _
          $region54: #{pairwise_distance_layer.1} parent=40 // pred_check_branch
            %687 = sbr.rel (0) target = $region56
          $region55: #{pairwise_distance_layer.1} parent=40 // pred_region
            loop: start=0, step=1, limit=1
            $region57: #{pairwise_distance_layer.1} parent=55 // loop_pre_header
              _
            $region58: #{pairwise_distance_layer.1} parent=55 // loop_header
              %s689 = sphi 0, %s693
              %p690 = scmp.ge.s32.totalorder %s689, 1
              %s694 = sphi [#allocation3], [#allocation3]
              %s695 = sphi %s4, %s4
            $region59: #{pairwise_distance_layer.1} parent=55 // loop_header_branch
              %692 = sbr.rel (%p690) target = $region63
            $region60: #{pairwise_distance_layer.1} parent=55 // loop_body
              %v696 = vld [vmem:[%s694] sm:$0xff]
              %697 = vst [vmem:[%s695] sm:$0xff] %v696
              %v698 = vld [vmem:[%s694 + $0x8] sm:$0xff]
              %699 = vst [vmem:[%s695 + $0x8] sm:$0xff] %v698
            $region61: #{pairwise_distance_layer.1} parent=55 // loop_footer
              %s693 = sadd.s32 1, %s689
            $region62: #{pairwise_distance_layer.1} parent=55 // loop_footer_branch
              %688 = sbr.rel target = $region58
            $region63: #{pairwise_distance_layer.1} parent=55 // loop_exit
              _
          $region56: #{pairwise_distance_layer.1} parent=40 // pred_fallthru
            _
          // Predicated region
          $region64: #{pairwise_distance_layer.1} parent=40 // pred_check
            _
          $region65: #{pairwise_distance_layer.1} parent=40 // pred_check_branch
            %701 = sbr.rel target = $region67
          $region66: #{pairwise_distance_layer.1} parent=40 // pred_region
            _
          $region67: #{pairwise_distance_layer.1} parent=40 // pred_fallthru
            _
        $region41: #{pairwise_distance_layer.1} parent=36 // pred_fallthru
          _
        // Predicated region
        $region42: #{pairwise_distance_layer.1} parent=36 // pred_check
          _
        $region43: #{pairwise_distance_layer.1} parent=36 // pred_check_branch
          %671 = sbr.rel target = $region45
        $region44: #{pairwise_distance_layer.1} parent=36 // pred_region
          %s673 = ssub.s32 256, 1
          loop: start=0, step=1, limit=1
          $region46: #{pairwise_distance_layer.1} parent=44 // loop_pre_header
            _
          $region47: #{pairwise_distance_layer.1} parent=44 // loop_header
            %s675 = sphi 0, %s679
            %p676 = scmp.ge.s32.totalorder %s675, 1
            %s680 = sphi [#allocation3], [#allocation3]
            %s681 = sphi %s4, %s4
          $region48: #{pairwise_distance_layer.1} parent=44 // loop_header_branch
            %678 = sbr.rel (%p676) target = $region52
          $region49: #{pairwise_distance_layer.1} parent=44 // loop_body
            %v682 = vld [vmem:[%s680] sm:%s673]
            %683 = vst [vmem:[%s681] sm:%s673] %v682
            %v684 = vld [vmem:[%s680 + $0x8] sm:%s673]
            %685 = vst [vmem:[%s681 + $0x8] sm:%s673] %v684
          $region50: #{pairwise_distance_layer.1} parent=44 // loop_footer
            %s679 = sadd.s32 1, %s675
          $region51: #{pairwise_distance_layer.1} parent=44 // loop_footer_branch
            %674 = sbr.rel target = $region47
          $region52: #{pairwise_distance_layer.1} parent=44 // loop_exit
            _
        $region45: #{pairwise_distance_layer.1} parent=36 // pred_fallthru
          _
      $region37: #{pairwise_distance_layer.1} parent=32 // pred_fallthru
        _
      %702 = vnop
    $region33: #{pairwise_distance_layer.1} parent=1 // pred_fallthru
      _
    // Predicated region
    $region68: #{pairwise_distance_layer.1} parent=1 // pred_check
      _
    $region69: #{pairwise_distance_layer.1} parent=1 // pred_check_branch
      %704 = sbr.rel (0) target = $region71
    $region70: #{pairwise_distance_layer.1} parent=1 // pred_region
      _
    $region71: #{pairwise_distance_layer.1} parent=1 // pred_fallthru
      _

</llo_original>
